<compile_context>
chip_gen: v7x
topology: tpu7x:2x2x1
jax: 0.10.0
libtpu: 0.0.40
codegen_flags: <defaults>
</compile_context>

<pallas_src>
import jax
import jax.numpy as jnp
import numpy as np
from jax import lax
from jax.experimental import pallas as pl
from jax.experimental.pallas import tpu as pltpu

_EPS = 1e-5


def _resblock_kernel(xp_ref, w1_ref, w2_ref, b1_ref, b2_ref, out_ref):
    """Fused ResidualBlock, lane-packed layout.

    xp_ref  : (H + 2, L)  f32 input rows, zero-padded by 1 row top/bottom (L = N*W*C)
    w1_ref  : (L, 3L)     bf16 conv1 kh-stacked band matrices, BN1 scale folded in
    w2_ref  : (L, 3L)     bf16 conv2 kh-stacked band matrices, BN2 scale folded in
    b1_ref  : (1, L)      f32 folded conv1-bias + BN1 offset
    b2_ref  : (1, L)      f32 folded conv2-bias + BN2 offset
    out_ref : (H, L)      f32
    """
    H, L = out_ref.shape
    xp = xp_ref[...]                                          # (H+2, L) f32

    # ---- conv1 + bn1: one bf16 (H+2, L) @ (L, 3L) MXU matmul, f32 accum ----
    y1 = jnp.dot(xp.astype(jnp.bfloat16), w1_ref[...],
                 preferred_element_type=jnp.float32)          # (H+2, 3L)
    # out_row[r] = sum_kh in_row[r+kh] @ B[kh]  -> three row-shifted VPU adds.
    acc1 = (y1[0:H, 0:L]
            + y1[1:H + 1, L:2 * L]
            + y1[2:H + 2, 2 * L:3 * L])                       # (H, L)
    h1 = jnp.maximum(acc1 + b1_ref[...], 0.0)                 # ReLU

    # ---- conv2 + bn2: one bf16 (H, L) @ (L, 3L) matmul ----------------------
    # The intermediate's zero halo rows are handled by zero-filling the
    # shifted kh=0 / kh=2 taps (no padded scratch, no iota mask).
    y2 = jnp.dot(h1.astype(jnp.bfloat16), w2_ref[...],
                 preferred_element_type=jnp.float32)          # (H, 3L)
    zrow = jnp.zeros((1, L), jnp.float32)
    up = jnp.concatenate([zrow, y2[0:H - 1, 0:L]], axis=0)          # kh=0 tap
    mid = y2[:, L:2 * L]                                            # kh=1 tap
    down = jnp.concatenate([y2[1:H, 2 * L:3 * L], zrow], axis=0)    # kh=2 tap
    h2 = up + mid + down + b2_ref[...]

    # ---- residual add (exact f32 input, read from the ref) + ReLU ----------
    out_ref[...] = jnp.maximum(h2 + xp_ref[pl.ds(1, H), :], 0.0)


def _fold_bn(gamma, beta, mean, var, conv_bias):
    scale = gamma / jnp.sqrt(var + _EPS)
    offset = scale * (conv_bias - mean) + beta
    return scale.astype(jnp.float32), offset.astype(jnp.float32)


def _stacked_band_weights(w_oihw, scale, N, W):
    """(Cout, Cin, 3, 3) OIHW conv weight -> (L, 3L) kh-stacked band matrices.

    B[kh][n*W*C + w_in*C + ci, n*W*C + w_out*C + co] = w[co, ci, kh, kw]*scale[co]
      with kw = w_in - w_out + 1 (zero outside the band and across images),
    so `out_row[r] = sum_kh in_row[r + kh - 1] @ B[kh]` is exactly the 3x3
    conv with padding=1 and the BN scale already folded in.  The three B[kh]
    are concatenated along the output dim so each conv is a single matmul.
    """
    C = w_oihw.shape[0]
    w = (w_oihw * scale[:, None, None, None]).astype(jnp.float32)
    eye_n = jnp.eye(N, dtype=jnp.float32)
    mats = []
    for kh in range(3):
        band = jnp.zeros((W * C, W * C), jnp.float32)
        for kw in range(3):
            shift = jnp.eye(W, k=-(kw - 1), dtype=jnp.float32)  # w_in = w_out + kw - 1
            blk = jnp.transpose(w[:, :, kh, kw])                 # (ci, co)
            band = band + jnp.kron(shift, blk)
        mats.append(jnp.kron(eye_n, band))                       # (L, L), block-diag over N
    return jnp.concatenate(mats, axis=1)                         # (L, 3L)


def make_residual_block(params, *, N, C, H, W):
    """Precompute the kernel operands ONCE and return a jitted NCHW forward.

    Matches the PyTorch module's forward with BatchNorm in eval/inference mode
    (running mean/var).
    TODO(synk): training-mode batch statistics are not reproduced.
    """
    L = N * W * C
    assert L % 128 == 0, "lane-packed layout wants N*W*C to be a multiple of 128"

    s1, b1 = _fold_bn(params["g1"], params["be1"], params["m1"], params["v1"], params["cb1"])
    s2, b2 = _fold_bn(params["g2"], params["be2"], params["m2"], params["v2"], params["cb2"])

    # bf16 weight storage: halves the dominant DMA and feeds the MXU natively.
    w1s = _stacked_band_weights(params["w1"], s1, N, W).astype(jnp.bfloat16)  # (L, 3L)
    w2s = _stacked_band_weights(params["w2"], s2, N, W).astype(jnp.bfloat16)  # (L, 3L)
    b1l = jnp.tile(b1, N * W)[None, :]                                        # (1, L) f32
    b2l = jnp.tile(b2, N * W)[None, :]                                        # (1, L) f32

    vmem = pl.BlockSpec(memory_space=pltpu.MemorySpace.VMEM)
    kernel_call = pl.pallas_call(
        _resblock_kernel,
        out_shape=jax.ShapeDtypeStruct((H, L), jnp.float32),
        in_specs=[vmem] * 5,
        out_specs=vmem,
    )

    @jax.jit
    def forward(x_nchw):
        # NCHW -> (H, N*W*C) lane-packed rows; 1 zero row top/bottom for the
        # H halo (the W halo / zero padding lives inside the band matrices).
        x_rows = jnp.transpose(x_nchw.astype(jnp.float32), (2, 0, 3, 1)).reshape(H, L)
        xp = jnp.pad(x_rows, ((1, 1), (0, 0)))
        out_rows = kernel_call(xp, w1s, w2s, b1l, b2l)
        return jnp.transpose(out_rows.reshape(H, N, W, C), (1, 3, 0, 2))

    return forward


def _ref_forward(x, p):
    """Pure-JAX f32 reference (NCHW), mirrors the PyTorch module in eval mode."""
    def conv(x, w, b):
        y = lax.conv_general_dilated(
            x, w, window_strides=(1, 1), padding=((1, 1), (1, 1)),
            dimension_numbers=("NCHW", "OIHW", "NCHW"))
        return y + b.reshape(1, -1, 1, 1)

    def bn(x, g, be, m, v):
        return ((x - m.reshape(1, -1, 1, 1))
                / jnp.sqrt(v.reshape(1, -1, 1, 1) + _EPS)
                * g.reshape(1, -1, 1, 1) + be.reshape(1, -1, 1, 1))

    h = jnp.maximum(bn(conv(x, p["w1"], p["cb1"]), p["g1"], p["be1"], p["m1"], p["v1"]), 0.0)
    h = bn(conv(h, p["w2"], p["cb2"]), p["g2"], p["be2"], p["m2"], p["v2"])
    return jnp.maximum(h + x, 0.0)


if __name__ == "__main__":
    N, C, H, W = 2, 4, 16, 16
    key = jax.random.PRNGKey(0)
    keys = jax.random.split(key, 12)

    # Deterministic synthetic parameters (shapes from ResidualBlock.__init__).
    params = {
        "w1":  0.1 * jax.random.normal(keys[0], (C, C, 3, 3), jnp.float32),
        "cb1": 0.05 * jax.random.normal(keys[1], (C,), jnp.float32),
        "w2":  0.1 * jax.random.normal(keys[2], (C, C, 3, 3), jnp.float32),
        "cb2": 0.05 * jax.random.normal(keys[3], (C,), jnp.float32),
        "g1":  1.0 + 0.1 * jax.random.normal(keys[4], (C,), jnp.float32),
        "be1": 0.1 * jax.random.normal(keys[5], (C,), jnp.float32),
        "m1":  0.1 * jax.random.normal(keys[6], (C,), jnp.float32),
        "v1":  jax.random.uniform(keys[7], (C,), jnp.float32, 0.5, 1.5),
        "g2":  1.0 + 0.1 * jax.random.normal(keys[8], (C,), jnp.float32),
        "be2": 0.1 * jax.random.normal(keys[9], (C,), jnp.float32),
        "m2":  0.1 * jax.random.normal(keys[10], (C,), jnp.float32),
        "v2":  jax.random.uniform(keys[11], (C,), jnp.float32, 0.5, 1.5),
    }

    x = jax.random.normal(jax.random.PRNGKey(0), (N, C, H, W), jnp.float32)

    # Band weights / folded biases are built exactly once here; the returned
    # `forward` is the cheap per-call path.
    forward = make_residual_block(params, N=N, C=C, H=H, W=W)

    out = jax.block_until_ready(forward(x))
    ref = jax.block_until_ready(_ref_forward(x, params))

    # bf16 MXU inputs (weights + activations, f32 accumulation, f32 residual)
    # give ~1e-2-level error vs. the f32 reference.
    np.testing.assert_allclose(np.asarray(out), np.asarray(ref), atol=3e-2, rtol=3e-2)

    print("KERNEL_OK")
</pallas_src>

<mosaic_0001>
module attributes {stable_mosaic.version = 11 : i64} {
  func.func @_resblock_kernel(%arg0: memref<18x128xf32, #tpu.memory_space<vmem>>, %arg1: memref<128x384xbf16, #tpu.memory_space<vmem>>, %arg2: memref<128x384xbf16, #tpu.memory_space<vmem>>, %arg3: memref<1x128xf32, #tpu.memory_space<vmem>>, %arg4: memref<1x128xf32, #tpu.memory_space<vmem>>, %arg5: memref<16x128xf32, #tpu.memory_space<vmem>>) attributes {dimension_semantics = [], scalar_prefetch = 0 : i64, scratch_operands = 0 : i64, tpu.core_type = #tpu.core_type<tc>} {
    %c0 = arith.constant 0 : index
    %c0_0 = arith.constant 0 : index
    %0 = vector.load %arg0[%c0, %c0_0] : memref<18x128xf32, #tpu.memory_space<vmem>>, vector<18x128xf32>
    %1 = arith.truncf %0 : vector<18x128xf32> to vector<18x128xbf16>
    %c0_1 = arith.constant 0 : index
    %c0_2 = arith.constant 0 : index
    %2 = vector.load %arg1[%c0_1, %c0_2] : memref<128x384xbf16, #tpu.memory_space<vmem>>, vector<128x384xbf16>
    %cst = arith.constant dense<0.000000e+00> : vector<18x384xf32>
    %3 = tpu.matmul %1, %2, %cst {dimension_numbers = #tpu.dot_dimension_numbers<[1], [0], [0], [1], [0, 0, 1, 1], [], []>} : vector<18x128xbf16>, vector<128x384xbf16>, vector<18x384xf32> -> vector<18x384xf32>
    %4 = vector.extract_strided_slice %3 {offsets = [0, 0], sizes = [16, 128], strides = [1, 1]} : vector<18x384xf32> to vector<16x128xf32>
    %5 = vector.extract_strided_slice %3 {offsets = [1, 128], sizes = [16, 128], strides = [1, 1]} : vector<18x384xf32> to vector<16x128xf32>
    %6 = arith.addf %4, %5 : vector<16x128xf32>
    %7 = vector.extract_strided_slice %3 {offsets = [2, 256], sizes = [16, 128], strides = [1, 1]} : vector<18x384xf32> to vector<16x128xf32>
    %8 = arith.addf %6, %7 : vector<16x128xf32>
    %c0_3 = arith.constant 0 : index
    %c0_4 = arith.constant 0 : index
    %9 = vector.load %arg3[%c0_3, %c0_4] : memref<1x128xf32, #tpu.memory_space<vmem>>, vector<1x128xf32>
    %10 = vector.broadcast %9 : vector<1x128xf32> to vector<16x128xf32>
    %11 = arith.addf %8, %10 : vector<16x128xf32>
    %cst_5 = arith.constant 0.000000e+00 : f32
    %12 = vector.broadcast %cst_5 : f32 to vector<16x128xf32>
    %13 = arith.maximumf %11, %12 : vector<16x128xf32>
    %14 = arith.truncf %13 : vector<16x128xf32> to vector<16x128xbf16>
    %c0_6 = arith.constant 0 : index
    %c0_7 = arith.constant 0 : index
    %15 = vector.load %arg2[%c0_6, %c0_7] : memref<128x384xbf16, #tpu.memory_space<vmem>>, vector<128x384xbf16>
    %cst_8 = arith.constant dense<0.000000e+00> : vector<16x384xf32>
    %16 = tpu.matmul %14, %15, %cst_8 {dimension_numbers = #tpu.dot_dimension_numbers<[1], [0], [0], [1], [0, 0, 1, 1], [], []>} : vector<16x128xbf16>, vector<128x384xbf16>, vector<16x384xf32> -> vector<16x384xf32>
    %cst_9 = arith.constant 0.000000e+00 : f32
    %17 = vector.broadcast %cst_9 : f32 to vector<1x128xf32>
    %18 = vector.extract_strided_slice %16 {offsets = [0, 0], sizes = [15, 128], strides = [1, 1]} : vector<16x384xf32> to vector<15x128xf32>
    %19 = tpu.concatenate %17, %18 in 0 : vector<1x128xf32>, vector<15x128xf32> -> vector<16x128xf32>
    %20 = vector.extract_strided_slice %16 {offsets = [0, 128], sizes = [16, 128], strides = [1, 1]} : vector<16x384xf32> to vector<16x128xf32>
    %21 = vector.extract_strided_slice %16 {offsets = [1, 256], sizes = [15, 128], strides = [1, 1]} : vector<16x384xf32> to vector<15x128xf32>
    %22 = tpu.concatenate %21, %17 in 0 : vector<15x128xf32>, vector<1x128xf32> -> vector<16x128xf32>
    %23 = arith.addf %19, %20 : vector<16x128xf32>
    %24 = arith.addf %23, %22 : vector<16x128xf32>
    %c0_10 = arith.constant 0 : index
    %c0_11 = arith.constant 0 : index
    %25 = vector.load %arg4[%c0_10, %c0_11] : memref<1x128xf32, #tpu.memory_space<vmem>>, vector<1x128xf32>
    %26 = vector.broadcast %25 : vector<1x128xf32> to vector<16x128xf32>
    %27 = arith.addf %24, %26 : vector<16x128xf32>
    %c1 = arith.constant 1 : index
    %c0_12 = arith.constant 0 : index
    %28 = vector.load %arg0[%c1, %c0_12] : memref<18x128xf32, #tpu.memory_space<vmem>>, vector<16x128xf32>
    %29 = arith.addf %27, %28 : vector<16x128xf32>
    %cst_13 = arith.constant 0.000000e+00 : f32
    %30 = vector.broadcast %cst_13 : f32 to vector<16x128xf32>
    %31 = arith.maximumf %29, %30 : vector<16x128xf32>
    %c0_14 = arith.constant 0 : index
    %c0_15 = arith.constant 0 : index
    %32 = vector.load %arg5[%c0_14, %c0_15] : memref<16x128xf32, #tpu.memory_space<vmem>>, vector<16x128xf32>
    tpu.vector_store %arg5[%c0_14, %c0_15], %31 {strides = array<i32>} : memref<16x128xf32, #tpu.memory_space<vmem>>, vector<16x128xf32>,
    return
  }
}

</mosaic_0001>

<llo_original>
// kernel: forward.1
$region0: #{forward.1}
  #allocation0 [shape = 'u32[]', space=smem, size = 0x4, offset = 0x4, fixed_abs, tag = 'smem constant byte address 0x4 - core index']
  #allocation1 [shape = 'u32[144,128]{1,0:T(1,128)}', space=vmem, size = 0x12000, scoped, tag = 'internal scratch']
  %s0 = inlined_call_operand.vmem [shape: f32[18,128], index: 0, kind: input, shape index: {}]
  %s1 = inlined_call_operand.vmem [shape: bf16[128,384], index: 1, kind: input, shape index: {}]
  %s2 = inlined_call_operand.vmem [shape: bf16[128,384], index: 2, kind: input, shape index: {}]
  %s3 = inlined_call_operand.vmem [shape: f32[1,128], index: 3, kind: input, shape index: {}]
  %s4 = inlined_call_operand.vmem [shape: f32[1,128], index: 4, kind: input, shape index: {}]
  %s5 = inlined_call_operand.vmem [shape: f32[16,128], index: 5, kind: output, shape index: {}]
  %s6 = sld [smem:[#allocation0]]
  $region30: #{forward.1} parent=0
    _
  %s8 = ssub.s32 1, %s6
  %s9 = scalar_select 0, %s8, %s6
  // Predicated region
  $region2: #{forward.1} parent=0 // pred_check
    _
  $region3: #{forward.1} parent=0 // pred_check_branch
    %11 = sbr.rel (0) target = $region5
  $region4: #{forward.1} parent=0 // pred_region
    _
  $region5: #{forward.1} parent=0 // pred_fallthru
    _
  // Predicated region
  $region6: #{forward.1} parent=0 // pred_check
    _
  $region7: #{forward.1} parent=0 // pred_check_branch
    %13 = sbr.rel (0) target = $region9
  $region8: #{forward.1} parent=0 // pred_region
    _
  $region9: #{forward.1} parent=0 // pred_fallthru
    _
  // Predicated region
  $region10: #{forward.1} parent=0 // pred_check
    _
  $region11: #{forward.1} parent=0 // pred_check_branch
    %15 = sbr.rel (0) target = $region13
  $region12: #{forward.1} parent=0 // pred_region
    _
  $region13: #{forward.1} parent=0 // pred_fallthru
    _
  // Predicated region
  $region14: #{forward.1} parent=0 // pred_check
    _
  $region15: #{forward.1} parent=0 // pred_check_branch
    %17 = sbr.rel (0) target = $region17
  $region16: #{forward.1} parent=0 // pred_region
    _
  $region17: #{forward.1} parent=0 // pred_fallthru
    _
  // Predicated region
  $region18: #{forward.1} parent=0 // pred_check
    _
  $region19: #{forward.1} parent=0 // pred_check_branch
    %19 = sbr.rel (0) target = $region21
  $region20: #{forward.1} parent=0 // pred_region
    _
  $region21: #{forward.1} parent=0 // pred_fallthru
    _
  %v21 = vld [vmem:[%s0] sm:$0xff]
  %v22 = vld [vmem:[%s0 + $0x8] sm:$0xff]
  %v23 = vld [vmem:[%s0 + $0x10] sm:$0x3]
  %v24 = vpack.c.bf16 %v22, %v21
  %v25 = vpack.c.bf16 %v23, %v23
  %v26 = vld [vmem:[%s1] sm:$0xff]
  %v27 = vld [vmem:[%s1 + $0x8] sm:$0xf]
  %v28 = vld [vmem:[%s1 + $0xc] sm:$0xff]
  %v29 = vld [vmem:[%s1 + $0x14] sm:$0xf]
  %v30 = vld [vmem:[%s1 + $0x18] sm:$0xff]
  %v31 = vld [vmem:[%s1 + $0x20] sm:$0xf]
  %v32 = vld [vmem:[%s1 + $0x24] sm:$0xff]
  %v33 = vld [vmem:[%s1 + $0x2c] sm:$0xf]
  %v34 = vld [vmem:[%s1 + $0x30] sm:$0xff]
  %v35 = vld [vmem:[%s1 + $0x38] sm:$0xf]
  %v36 = vld [vmem:[%s1 + $0x3c] sm:$0xff]
  %v37 = vld [vmem:[%s1 + $0x44] sm:$0xf]
  %v38 = vld [vmem:[%s1 + $0x48] sm:$0xff]
  %v39 = vld [vmem:[%s1 + $0x50] sm:$0xf]
  %v40 = vld [vmem:[%s1 + $0x54] sm:$0xff]
  %v41 = vld [vmem:[%s1 + $0x5c] sm:$0xf]
  %v42 = vld [vmem:[%s1 + $0x60] sm:$0xff]
  %v43 = vld [vmem:[%s1 + $0x68] sm:$0xf]
  %v44 = vld [vmem:[%s1 + $0x6c] sm:$0xff]
  %v45 = vld [vmem:[%s1 + $0x74] sm:$0xf]
  %v46 = vld [vmem:[%s1 + $0x78] sm:$0xff]
  %v47 = vld [vmem:[%s1 + $0x80] sm:$0xf]
  %v48 = vld [vmem:[%s1 + $0x84] sm:$0xff]
  %v49 = vld [vmem:[%s1 + $0x8c] sm:$0xf]
  %v50 = vld [vmem:[%s1 + $0x90] sm:$0xff]
  %v51 = vld [vmem:[%s1 + $0x98] sm:$0xf]
  %v52 = vld [vmem:[%s1 + $0x9c] sm:$0xff]
  %v53 = vld [vmem:[%s1 + $0xa4] sm:$0xf]
  %v54 = vld [vmem:[%s1 + $0xa8] sm:$0xff]
  %v55 = vld [vmem:[%s1 + $0xb0] sm:$0xf]
  %v56 = vld [vmem:[%s1 + $0xb4] sm:$0xff]
  %v57 = vld [vmem:[%s1 + $0xbc] sm:$0xf]
  %v90 = vunpack.c.l.b16 %v26
  %v91 = vunpack.c.h.b16 %v26
  %v92 = vunpack.c.l.b16 %v27
  %v93 = vunpack.c.l.b16 %v28
  %v94 = vunpack.c.h.b16 %v28
  %v95 = vunpack.c.l.b16 %v29
  %v96 = vunpack.c.l.b16 %v30
  %v97 = vunpack.c.h.b16 %v30
  %v98 = vunpack.c.l.b16 %v31
  %v99 = vunpack.c.l.b16 %v32
  %v100 = vunpack.c.h.b16 %v32
  %v101 = vunpack.c.l.b16 %v33
  %v102 = vunpack.c.l.b16 %v34
  %v103 = vunpack.c.h.b16 %v34
  %v104 = vunpack.c.l.b16 %v35
  %v105 = vunpack.c.l.b16 %v36
  %v106 = vunpack.c.h.b16 %v36
  %v107 = vunpack.c.l.b16 %v37
  %v108 = vunpack.c.l.b16 %v38
  %v109 = vunpack.c.h.b16 %v38
  %v110 = vunpack.c.l.b16 %v39
  %v111 = vunpack.c.l.b16 %v40
  %v112 = vunpack.c.h.b16 %v40
  %v113 = vunpack.c.l.b16 %v41
  %v114 = vunpack.c.l.b16 %v42
  %v115 = vunpack.c.h.b16 %v42
  %v116 = vunpack.c.l.b16 %v43
  %v117 = vunpack.c.l.b16 %v44
  %v118 = vunpack.c.h.b16 %v44
  %v119 = vunpack.c.l.b16 %v45
  %v120 = vunpack.c.l.b16 %v46
  %v121 = vunpack.c.h.b16 %v46
  %v122 = vunpack.c.l.b16 %v47
  %v123 = vunpack.c.l.b16 %v48
  %v124 = vunpack.c.h.b16 %v48
  %v125 = vunpack.c.l.b16 %v49
  %v126 = vunpack.c.l.b16 %v50
  %v127 = vunpack.c.h.b16 %v50
  %v128 = vunpack.c.l.b16 %v51
  %v129 = vunpack.c.l.b16 %v52
  %v130 = vunpack.c.h.b16 %v52
  %v131 = vunpack.c.l.b16 %v53
  %v132 = vunpack.c.l.b16 %v54
  %v133 = vunpack.c.h.b16 %v54
  %v134 = vunpack.c.l.b16 %v55
  %v135 = vunpack.c.l.b16 %v56
  %v136 = vunpack.c.h.b16 %v56
  %v137 = vunpack.c.l.b16 %v57
  %v138 = vpack.c.b16 %v93, %v90
  %v139 = vpack.c.b16 %v94, %v91
  %v140 = vpack.c.b16 %v95, %v92
  %v141 = vpack.c.b16 %v99, %v96
  %v142 = vpack.c.b16 %v100, %v97
  %v143 = vpack.c.b16 %v101, %v98
  %v144 = vpack.c.b16 %v105, %v102
  %v145 = vpack.c.b16 %v106, %v103
  %v146 = vpack.c.b16 %v107, %v104
  %v147 = vpack.c.b16 %v111, %v108
  %v148 = vpack.c.b16 %v112, %v109
  %v149 = vpack.c.b16 %v113, %v110
  %v150 = vpack.c.b16 %v117, %v114
  %v151 = vpack.c.b16 %v118, %v115
  %v152 = vpack.c.b16 %v119, %v116
  %v153 = vpack.c.b16 %v123, %v120
  %v154 = vpack.c.b16 %v124, %v121
  %v155 = vpack.c.b16 %v125, %v122
  %v156 = vpack.c.b16 %v129, %v126
  %v157 = vpack.c.b16 %v130, %v127
  %v158 = vpack.c.b16 %v131, %v128
  %v159 = vpack.c.b16 %v135, %v132
  %v160 = vpack.c.b16 %v136, %v133
  %v161 = vpack.c.b16 %v137, %v134
  %186 = vmatprep.subr.bf16.mxu0 %v139
  %187 = vmatpush1.bf16.msra.mxu0 %v138
  %188 = vmatprep.subr.bf16.mxu0 %v142
  %189 = vmatpush1.bf16.msra.mxu0 %v141
  %190 = vmatprep.subr.bf16.mxu0 %v145
  %191 = vmatpush1.bf16.msra.mxu0 %v144
  %192 = vmatprep.subr.bf16.mxu0 %v148
  %193 = vmatpush1.bf16.msra.mxu0 %v147
  %194 = vmatprep.subr.bf16.mxu0 %v151
  %195 = vmatpush1.bf16.msra.mxu0 %v150
  %196 = vmatprep.subr.bf16.mxu0 %v154
  %197 = vmatpush1.bf16.msra.mxu0 %v153
  %198 = vmatprep.subr.bf16.mxu0 %v157
  %199 = vmatpush1.bf16.msra.mxu0 %v156
  %200 = vmatprep.subr.bf16.mxu0 %v160
  %201 = vmatpush1.bf16.msra.mxu0 %v159
  %202 = vmatprep.subr.bf16.mxu0 0
  %203 = vmatpush1.bf16.msra.mxu0 0
  %204 = vmatprep.subr.bf16.mxu0 0
  %205 = vmatpush1.bf16.msra.mxu0 0
  %206 = vmatprep.subr.bf16.mxu0 0
  %207 = vmatpush1.bf16.msra.mxu0 0
  %208 = vmatprep.subr.bf16.mxu0 0
  %209 = vmatpush1.bf16.msra.mxu0 0
  %210 = vmatprep.subr.bf16.mxu0 0
  %211 = vmatpush1.bf16.msra.mxu0 0
  %212 = vmatprep.subr.bf16.mxu0 0
  %213 = vmatpush1.bf16.msra.mxu0 0
  %214 = vmatprep.subr.bf16.mxu0 0
  %215 = vmatpush1.bf16.msra.mxu0 0
  %216 = vmatprep.subr.bf16.mxu0 0
  %217 = vmatpush1.bf16.msra.mxu0 0
  %218 = vmatprep.mubr.bf16.mxu0 0
  %219 = vmatmul.mubr.bf16.gmra.mrb[0].mxu0 %v24
  %v220 = vpop.f32.mrb[0].mxu0
  %v221 = vadd.f32 0.0, %v220
  %v222 = vpop.f32.mrb[0].mxu0
  %v223 = vadd.f32 0.0, %v222
  %v224 = vpop.f32.mrb[0].mxu0
  %v225 = vadd.f32 0.0, %v224
  %v226 = vpop.f32.mrb[0].mxu0
  %v227 = vadd.f32 0.0, %v226
  %228 = vmatprep.mubr.bf16.mxu0 0
  %229 = vmatmul.mubr.bf16.gmra.mrb[0].mxu0 %v25
  %v230 = vpop.f32.mrb[0].mxu0
  %v231 = vpop.f32.mrb[0].mxu0
  %v232 = vadd.f32 0.0, %v231
  %v233 = vpop.f32.mrb[0].mxu0
  %v234 = vpop.f32.mrb[0].mxu0
  %235 = vdwg.mxu0
  %236 = vmatprep.subr.bf16.mxu0 0
  %237 = vmatpush1.bf16.msra.mxu0 %v140
  %238 = vmatprep.subr.bf16.mxu0 0
  %239 = vmatpush1.bf16.msra.mxu0 %v143
  %240 = vmatprep.subr.bf16.mxu0 0
  %241 = vmatpush1.bf16.msra.mxu0 %v146
  %242 = vmatprep.subr.bf16.mxu0 0
  %243 = vmatpush1.bf16.msra.mxu0 %v149
  %244 = vmatprep.subr.bf16.mxu0 0
  %245 = vmatpush1.bf16.msra.mxu0 %v152
  %246 = vmatprep.subr.bf16.mxu0 0
  %247 = vmatpush1.bf16.msra.mxu0 %v155
  %248 = vmatprep.subr.bf16.mxu0 0
  %249 = vmatpush1.bf16.msra.mxu0 %v158
  %250 = vmatprep.subr.bf16.mxu0 0
  %251 = vmatpush1.bf16.msra.mxu0 %v161
  %252 = vmatprep.subr.bf16.mxu0 0
  %253 = vmatpush1.bf16.msra.mxu0 0
  %254 = vmatprep.subr.bf16.mxu0 0
  %255 = vmatpush1.bf16.msra.mxu0 0
  %256 = vmatprep.subr.bf16.mxu0 0
  %257 = vmatpush1.bf16.msra.mxu0 0
  %258 = vmatprep.subr.bf16.mxu0 0
  %259 = vmatpush1.bf16.msra.mxu0 0
  %260 = vmatprep.subr.bf16.mxu0 0
  %261 = vmatpush1.bf16.msra.mxu0 0
  %262 = vmatprep.subr.bf16.mxu0 0
  %263 = vmatpush1.bf16.msra.mxu0 0
  %264 = vmatprep.subr.bf16.mxu0 0
  %265 = vmatpush1.bf16.msra.mxu0 0
  %266 = vmatprep.subr.bf16.mxu0 0
  %267 = vmatpush1.bf16.msra.mxu0 0
  %268 = vmatprep.mubr.bf16.mxu0 0
  %269 = vmatmul.mubr.bf16.gmra.mrb[0].mxu0 %v24
  %v270 = vpop.f32.mrb[0].mxu0
  %v271 = vadd.f32 0.0, %v270
  %v272 = vpop.f32.mrb[0].mxu0
  %v273 = vpop.f32.mrb[0].mxu0
  %v274 = vadd.f32 0.0, %v273
  %v275 = vpop.f32.mrb[0].mxu0
  %276 = vmatprep.mubr.bf16.mxu0 0
  %277 = vmatmul.mubr.bf16.gmra.mrb[0].mxu0 %v25
  %v278 = vpop.f32.mrb[0].mxu0
  %v279 = vadd.f32 0.0, %v278
  %v280 = vpop.f32.mrb[0].mxu0
  %v281 = vpop.f32.mrb[0].mxu0
  %v282 = vpop.f32.mrb[0].mxu0
  %283 = vdwg.mxu0
  %vm287 = vcmask 1046528
  %v288 = vrot.slane %v223, 1
  %v289 = vrot.slane %v227, 1
  %v290 = vsel %vm287, %v288, %v289
  %v291 = vrot.slane %v232, 1
  %v292 = vsel %vm287, %v289, %v291
  %v295 = vadd.f32 %v221, %v290
  %v296 = vadd.f32 %v225, %v292
  %vm300 = vcmask 1045504
  %v301 = vrot.slane %v271, 2
  %v302 = vrot.slane %v274, 2
  %v303 = vsel %vm300, %v301, %v302
  %v304 = vrot.slane %v279, 2
  %v305 = vsel %vm300, %v302, %v304
  %v308 = vadd.f32 %v295, %v303
  %v309 = vadd.f32 %v296, %v305
  %v310 = vld [vmem:[%s3] sm:$0x1]
  %v312 = vlaneseq
  %v313 = vshrl.u32 %v312, 7
  %v314 = vsub.s32 0, %v313
  %v315 = vrot.slane %v310, %v314
  %v317 = vadd.f32 %v308, %v315
  %v318 = vadd.f32 %v309, %v315
  %v319 = vmax.f32 %v317, 0.0
  %v320 = vmax.f32 %v318, 0.0
  %v321 = vpack.c.bf16 %v320, %v319
  %v322 = vld [vmem:[%s2] sm:$0xff]
  %v323 = vld [vmem:[%s2 + $0x8] sm:$0xf]
  %v324 = vld [vmem:[%s2 + $0xc] sm:$0xff]
  %v325 = vld [vmem:[%s2 + $0x14] sm:$0xf]
  %v326 = vld [vmem:[%s2 + $0x18] sm:$0xff]
  %v327 = vld [vmem:[%s2 + $0x20] sm:$0xf]
  %v328 = vld [vmem:[%s2 + $0x24] sm:$0xff]
  %v329 = vld [vmem:[%s2 + $0x2c] sm:$0xf]
  %v330 = vld [vmem:[%s2 + $0x30] sm:$0xff]
  %v331 = vld [vmem:[%s2 + $0x38] sm:$0xf]
  %v332 = vld [vmem:[%s2 + $0x3c] sm:$0xff]
  %v333 = vld [vmem:[%s2 + $0x44] sm:$0xf]
  %v334 = vld [vmem:[%s2 + $0x48] sm:$0xff]
  %v335 = vld [vmem:[%s2 + $0x50] sm:$0xf]
  %v336 = vld [vmem:[%s2 + $0x54] sm:$0xff]
  %v337 = vld [vmem:[%s2 + $0x5c] sm:$0xf]
  %v338 = vld [vmem:[%s2 + $0x60] sm:$0xff]
  %v339 = vld [vmem:[%s2 + $0x68] sm:$0xf]
  %v340 = vld [vmem:[%s2 + $0x6c] sm:$0xff]
  %v341 = vld [vmem:[%s2 + $0x74] sm:$0xf]
  %v342 = vld [vmem:[%s2 + $0x78] sm:$0xff]
  %v343 = vld [vmem:[%s2 + $0x80] sm:$0xf]
  %v344 = vld [vmem:[%s2 + $0x84] sm:$0xff]
  %v345 = vld [vmem:[%s2 + $0x8c] sm:$0xf]
  %v346 = vld [vmem:[%s2 + $0x90] sm:$0xff]
  %v347 = vld [vmem:[%s2 + $0x98] sm:$0xf]
  %v348 = vld [vmem:[%s2 + $0x9c] sm:$0xff]
  %v349 = vld [vmem:[%s2 + $0xa4] sm:$0xf]
  %v350 = vld [vmem:[%s2 + $0xa8] sm:$0xff]
  %v351 = vld [vmem:[%s2 + $0xb0] sm:$0xf]
  %v352 = vld [vmem:[%s2 + $0xb4] sm:$0xff]
  %v353 = vld [vmem:[%s2 + $0xbc] sm:$0xf]
  %v386 = vunpack.c.l.b16 %v322
  %v387 = vunpack.c.h.b16 %v322
  %v388 = vunpack.c.l.b16 %v323
  %v389 = vunpack.c.l.b16 %v324
  %v390 = vunpack.c.h.b16 %v324
  %v391 = vunpack.c.l.b16 %v325
  %v392 = vunpack.c.l.b16 %v326
  %v393 = vunpack.c.h.b16 %v326
  %v394 = vunpack.c.l.b16 %v327
  %v395 = vunpack.c.l.b16 %v328
  %v396 = vunpack.c.h.b16 %v328
  %v397 = vunpack.c.l.b16 %v329
  %v398 = vunpack.c.l.b16 %v330
  %v399 = vunpack.c.h.b16 %v330
  %v400 = vunpack.c.l.b16 %v331
  %v401 = vunpack.c.l.b16 %v332
  %v402 = vunpack.c.h.b16 %v332
  %v403 = vunpack.c.l.b16 %v333
  %v404 = vunpack.c.l.b16 %v334
  %v405 = vunpack.c.h.b16 %v334
  %v406 = vunpack.c.l.b16 %v335
  %v407 = vunpack.c.l.b16 %v336
  %v408 = vunpack.c.h.b16 %v336
  %v409 = vunpack.c.l.b16 %v337
  %v410 = vunpack.c.l.b16 %v338
  %v411 = vunpack.c.h.b16 %v338
  %v412 = vunpack.c.l.b16 %v339
  %v413 = vunpack.c.l.b16 %v340
  %v414 = vunpack.c.h.b16 %v340
  %v415 = vunpack.c.l.b16 %v341
  %v416 = vunpack.c.l.b16 %v342
  %v417 = vunpack.c.h.b16 %v342
  %v418 = vunpack.c.l.b16 %v343
  %v419 = vunpack.c.l.b16 %v344
  %v420 = vunpack.c.h.b16 %v344
  %v421 = vunpack.c.l.b16 %v345
  %v422 = vunpack.c.l.b16 %v346
  %v423 = vunpack.c.h.b16 %v346
  %v424 = vunpack.c.l.b16 %v347
  %v425 = vunpack.c.l.b16 %v348
  %v426 = vunpack.c.h.b16 %v348
  %v427 = vunpack.c.l.b16 %v349
  %v428 = vunpack.c.l.b16 %v350
  %v429 = vunpack.c.h.b16 %v350
  %v430 = vunpack.c.l.b16 %v351
  %v431 = vunpack.c.l.b16 %v352
  %v432 = vunpack.c.h.b16 %v352
  %v433 = vunpack.c.l.b16 %v353
  %v434 = vpack.c.b16 %v389, %v386
  %v435 = vpack.c.b16 %v390, %v387
  %v436 = vpack.c.b16 %v391, %v388
  %v437 = vpack.c.b16 %v395, %v392
  %v438 = vpack.c.b16 %v396, %v393
  %v439 = vpack.c.b16 %v397, %v394
  %v440 = vpack.c.b16 %v401, %v398
  %v441 = vpack.c.b16 %v402, %v399
  %v442 = vpack.c.b16 %v403, %v400
  %v443 = vpack.c.b16 %v407, %v404
  %v444 = vpack.c.b16 %v408, %v405
  %v445 = vpack.c.b16 %v409, %v406
  %v446 = vpack.c.b16 %v413, %v410
  %v447 = vpack.c.b16 %v414, %v411
  %v448 = vpack.c.b16 %v415, %v412
  %v449 = vpack.c.b16 %v419, %v416
  %v450 = vpack.c.b16 %v420, %v417
  %v451 = vpack.c.b16 %v421, %v418
  %v452 = vpack.c.b16 %v425, %v422
  %v453 = vpack.c.b16 %v426, %v423
  %v454 = vpack.c.b16 %v427, %v424
  %v455 = vpack.c.b16 %v431, %v428
  %v456 = vpack.c.b16 %v432, %v429
  %v457 = vpack.c.b16 %v433, %v430
  %482 = vmatprep.subr.bf16.mxu0 %v435
  %483 = vmatpush1.bf16.msra.mxu0 %v434
  %484 = vmatprep.subr.bf16.mxu0 %v438
  %485 = vmatpush1.bf16.msra.mxu0 %v437
  %486 = vmatprep.subr.bf16.mxu0 %v441
  %487 = vmatpush1.bf16.msra.mxu0 %v440
  %488 = vmatprep.subr.bf16.mxu0 %v444
  %489 = vmatpush1.bf16.msra.mxu0 %v443
  %490 = vmatprep.subr.bf16.mxu0 %v447
  %491 = vmatpush1.bf16.msra.mxu0 %v446
  %492 = vmatprep.subr.bf16.mxu0 %v450
  %493 = vmatpush1.bf16.msra.mxu0 %v449
  %494 = vmatprep.subr.bf16.mxu0 %v453
  %495 = vmatpush1.bf16.msra.mxu0 %v452
  %496 = vmatprep.subr.bf16.mxu0 %v456
  %497 = vmatpush1.bf16.msra.mxu0 %v455
  %498 = vmatprep.subr.bf16.mxu0 0
  %499 = vmatpush1.bf16.msra.mxu0 0
  %500 = vmatprep.subr.bf16.mxu0 0
  %501 = vmatpush1.bf16.msra.mxu0 0
  %502 = vmatprep.subr.bf16.mxu0 0
  %503 = vmatpush1.bf16.msra.mxu0 0
  %504 = vmatprep.subr.bf16.mxu0 0
  %505 = vmatpush1.bf16.msra.mxu0 0
  %506 = vmatprep.subr.bf16.mxu0 0
  %507 = vmatpush1.bf16.msra.mxu0 0
  %508 = vmatprep.subr.bf16.mxu0 0
  %509 = vmatpush1.bf16.msra.mxu0 0
  %510 = vmatprep.subr.bf16.mxu0 0
  %511 = vmatpush1.bf16.msra.mxu0 0
  %512 = vmatprep.subr.bf16.mxu0 0
  %513 = vmatpush1.bf16.msra.mxu0 0
  %514 = vmatprep.mubr.bf16.mxu0 0
  %515 = vmatmul.mubr.bf16.gmra.mrb[0].mxu0 %v321
  %v516 = vpop.f32.mrb[0].mxu0
  %v517 = vadd.f32 0.0, %v516
  %v518 = vpop.f32.mrb[0].mxu0
  %v519 = vadd.f32 0.0, %v518
  %v520 = vpop.f32.mrb[0].mxu0
  %v521 = vadd.f32 0.0, %v520
  %v522 = vpop.f32.mrb[0].mxu0
  %v523 = vadd.f32 0.0, %v522
  %524 = vdwg.mxu0
  %525 = vmatprep.subr.bf16.mxu0 0
  %526 = vmatpush1.bf16.msra.mxu0 %v436
  %527 = vmatprep.subr.bf16.mxu0 0
  %528 = vmatpush1.bf16.msra.mxu0 %v439
  %529 = vmatprep.subr.bf16.mxu0 0
  %530 = vmatpush1.bf16.msra.mxu0 %v442
  %531 = vmatprep.subr.bf16.mxu0 0
  %532 = vmatpush1.bf16.msra.mxu0 %v445
  %533 = vmatprep.subr.bf16.mxu0 0
  %534 = vmatpush1.bf16.msra.mxu0 %v448
  %535 = vmatprep.subr.bf16.mxu0 0
  %536 = vmatpush1.bf16.msra.mxu0 %v451
  %537 = vmatprep.subr.bf16.mxu0 0
  %538 = vmatpush1.bf16.msra.mxu0 %v454
  %539 = vmatprep.subr.bf16.mxu0 0
  %540 = vmatpush1.bf16.msra.mxu0 %v457
  %541 = vmatprep.subr.bf16.mxu0 0
  %542 = vmatpush1.bf16.msra.mxu0 0
  %543 = vmatprep.subr.bf16.mxu0 0
  %544 = vmatpush1.bf16.msra.mxu0 0
  %545 = vmatprep.subr.bf16.mxu0 0
  %546 = vmatpush1.bf16.msra.mxu0 0
  %547 = vmatprep.subr.bf16.mxu0 0
  %548 = vmatpush1.bf16.msra.mxu0 0
  %549 = vmatprep.subr.bf16.mxu0 0
  %550 = vmatpush1.bf16.msra.mxu0 0
  %551 = vmatprep.subr.bf16.mxu0 0
  %552 = vmatpush1.bf16.msra.mxu0 0
  %553 = vmatprep.subr.bf16.mxu0 0
  %554 = vmatpush1.bf16.msra.mxu0 0
  %555 = vmatprep.subr.bf16.mxu0 0
  %556 = vmatpush1.bf16.msra.mxu0 0
  %557 = vmatprep.mubr.bf16.mxu0 0
  %558 = vmatmul.mubr.bf16.gmra.mrb[0].mxu0 %v321
  %v559 = vpop.f32.mrb[0].mxu0
  %v560 = vadd.f32 0.0, %v559
  %v561 = vpop.f32.mrb[0].mxu0
  %v562 = vpop.f32.mrb[0].mxu0
  %v563 = vadd.f32 0.0, %v562
  %v564 = vpop.f32.mrb[0].mxu0
  %565 = vdwg.mxu0
  %vm568 = vcmask 1040384
  %v569 = vrot.slane %v517, 7
  %v570 = vrot.slane %v521, 7
  %v571 = vsel %vm568, %v569, %v570
  %v574 = vsel %vm568, 0.0, %v569
  %v577 = vrot.slane %v560, 1
  %v578 = vrot.slane %v563, 1
  %v579 = vsel %vm287, %v577, %v578
  %v582 = vsel %vm287, %v578, 0.0
  %v583 = vadd.f32 %v574, %v519
  %v584 = vadd.f32 %v571, %v523
  %v585 = vadd.f32 %v583, %v579
  %v586 = vadd.f32 %v584, %v582
  %v587 = vld [vmem:[%s4] sm:$0x1]
  %v589 = vlaneseq
  %v590 = vshrl.u32 %v589, 7
  %v591 = vsub.s32 0, %v590
  %v592 = vrot.slane %v587, %v591
  %v594 = vadd.f32 %v585, %v592
  %v595 = vadd.f32 %v586, %v592
  %v596 = vld [vmem:[%s0 + $0x1] sm:$0xff]
  %v597 = vld [vmem:[%s0 + $0x9] sm:$0xff]
  %v598 = vadd.f32 %v594, %v596
  %v599 = vadd.f32 %v595, %v597
  %v600 = vmax.f32 %v598, 0.0
  %v601 = vmax.f32 %v599, 0.0
  %602 = vst [vmem:[%s5] sm:$0xff] %v600
  %603 = vst [vmem:[%s5 + $0x8] sm:$0xff] %v601
  // Predicated region
  $region22: #{forward.1} parent=0 // pred_check
    _
  $region23: #{forward.1} parent=0 // pred_check_branch
    %605 = sbr.rel (0) target = $region25
  $region24: #{forward.1} parent=0 // pred_region
    _
  $region25: #{forward.1} parent=0 // pred_fallthru
    _
  // Predicated region
  $region26: #{forward.1} parent=0 // pred_check
    _
  $region27: #{forward.1} parent=0 // pred_check_branch
    %607 = sbr.rel (0) target = $region29
  $region28: #{forward.1} parent=0 // pred_region
    _
  $region29: #{forward.1} parent=0 // pred_fallthru
    _

</llo_original>
